<compile_context>
chip_gen: v7x
topology: tpu7x:2x2x1
jax: 0.10.0
libtpu: 0.0.40
codegen_flags: <defaults>
</compile_context>

<pallas_src>
import functools

import jax
import jax.numpy as jnp
from jax import lax
from jax.experimental import pallas as pl
from jax.experimental.pallas import tpu as pltpu

# ---- static module config (QModule defaults, small synthetic sizes) ----
GROUP_N = 3          # args.group_num
A_BIT = 8
W_BIT = 8
HALF_WAVE = "A"      # default half_wave
DIM = 192            # module default channel dim (padded to 256 lanes inside)

_LANE = 128
_SUBLANE = 8
_VMEM_LIMIT_BYTES = 32 << 20       # explicit scoped-VMEM limit, safe v5e/v6e/v7x
_DEFAULT_BLOCK_BUDGET = 2 << 20    # ~2 MiB per block => ~4096 rows at C=128 f32


# ----------------------------- tiling helpers ------------------------------
def _round_up(n, m):
    return ((n + m - 1) // m) * m


def _pick_row_tile(total_rows, lane_width, itemsize, block_budget_bytes):
    """Rows per block from a byte budget, rounded down to a sublane multiple.

    The grid uses pl.cdiv, so the tile never has to divide total_rows (the
    ragged last block is clipped by Pallas).  Tiny inputs collapse to a single
    full-extent block, which is always a legal BlockSpec."""
    t = block_budget_bytes // max(1, lane_width * itemsize)
    t = max(_SUBLANE, (t // _SUBLANE) * _SUBLANE)
    if t >= total_rows:
        return total_rows
    return t


# ------------------------- activation quant kernel -------------------------
def _act_quant_kernel(ranges_ref, inv_sf_ref, x_ref, scale_ref, o_ref, *,
                      group_n, half_wave):
    # x_ref: (TILE_ROWS, Cpad) VMEM; scale_ref: (group_n, Cpad) VMEM (resident);
    # ranges_ref / inv_sf_ref: (group_n,) SMEM scalars.
    x = x_ref[...].astype(jnp.float32)
    if half_wave == "A":
        xp = jnp.maximum(x, 0.0)               # hoisted out of the group loop
    acc = None
    for g in range(group_n):                   # static unrolled group loop
        r = ranges_ref[g]                      # scalar branch range (assumed >= 0)
        inv_sf = inv_sf_ref[g]                 # (2^a_bit - 1)/r, 0 if r == 0
        if half_wave == "A":
            ori = jnp.minimum(xp, r)           # == clip(x, 0, r) == 0.5*(|x|-|x-r|+r)
        else:  # half_wave == "Q" — literal PyTorch formula (simplifies to r).
            # TODO(synk): upstream Quant 'Q' branch reduces to the constant r;
            # kept verbatim for forward-pass fidelity (dead under default 'A').
            ori = 0.5 * (jnp.abs(-x + r) - jnp.abs(x - r) + r + r)
        # scale_ref[g,:] = softmax(alpha)[g,:] * sf_g (sf_g = r/(2^a_bit-1));
        # zero when r == 0, so a disabled branch contributes exactly 0.
        term = jnp.round(ori * inv_sf) * scale_ref[g, :]
        acc = term if acc is None else acc + term
    o_ref[...] = acc.astype(o_ref.dtype)


def quantize_activation(inputs, groups_range1, alpha_activ, a_bit=A_BIT,
                        half_wave=HALF_WAVE,
                        block_budget_bytes=_DEFAULT_BLOCK_BUDGET):
    B, N, C = inputs.shape
    group_n = groups_range1.shape[0]
    out_dtype = inputs.dtype
    rows = B * N
    x2 = inputs.reshape(rows, C)                   # no dtype cast: native HBM I/O

    # tiny parameter glue in plain XLA (scalars / (group_n, C) vectors only)
    ranges = groups_range1.astype(jnp.float32)                     # (group_n,)
    denom = 2.0 ** a_bit - 1.0
    sf = ranges / denom
    inv_sf = jnp.where(ranges == 0.0, 0.0, denom / ranges)         # scalar recips
    sw = jax.nn.softmax(alpha_activ.astype(jnp.float32), axis=0)   # (group_n, C)
    scale = sw * sf[:, None]                       # quant scale folded into sw

    # keep the lane dim a multiple of 128 (module default C=192 would otherwise
    # hit masked partial stores on every output block); slice back afterwards.
    c_pad = _round_up(C, _LANE)
    if c_pad != C:
        x2 = jnp.pad(x2, ((0, 0), (0, c_pad - C)))
        scale = jnp.pad(scale, ((0, 0), (0, c_pad - C)))

    itemsize = jnp.dtype(out_dtype).itemsize
    tr = _pick_row_tile(rows, c_pad, itemsize, block_budget_bytes)
    grid = (pl.cdiv(rows, tr),)

    kernel = functools.partial(_act_quant_kernel, group_n=group_n,
                               half_wave=half_wave)
    out2 = pl.pallas_call(
        kernel,
        out_shape=jax.ShapeDtypeStruct((rows, c_pad), out_dtype),
        grid=grid,
        in_specs=[
            pl.BlockSpec(memory_space=pltpu.MemorySpace.SMEM),   # ranges
            pl.BlockSpec(memory_space=pltpu.MemorySpace.SMEM),   # inv scales
            pl.BlockSpec((tr, c_pad), lambda i: (i, 0)),         # input row tile
            pl.BlockSpec((group_n, c_pad), lambda i: (0, 0)),    # folded scales
        ],
        out_specs=pl.BlockSpec((tr, c_pad), lambda i: (i, 0)),
        compiler_params=pltpu.CompilerParams(
            dimension_semantics=("parallel",),
            vmem_limit_bytes=_VMEM_LIMIT_BYTES),
    )(ranges, inv_sf, x2, scale)
    if c_pad != C:
        out2 = out2[:, :C]
    return out2.reshape(B, N, C)


# --------------------------- weight quant kernel ---------------------------
def _weight_quant_kernel(params_ref, w_ref, o_ref, *, w_bit):
    # params_ref SMEM: [thr, sf, inv_sf]; w_ref: (TILE_CO, Ci) VMEM tile.
    w = w_ref[...].astype(jnp.float32)
    thr = params_ref[0]
    wc = jnp.clip(w, -thr, thr)
    if w_bit > 1:
        sf = params_ref[1]
        inv_sf = params_ref[2]          # 0 if thr == 0 -> output 0, no NaN
        wq = jnp.round(wc * inv_sf) * sf
    else:
        sf = params_ref[1]              # mean(|w|) hoisted to the wrapper
        wq = jnp.sign(wc) * sf
    o_ref[...] = wq.astype(o_ref.dtype)


def quantize_weight(weight, weight_range, w_bit=W_BIT,
                    block_budget_bytes=_DEFAULT_BLOCK_BUDGET):
    Co, Ci = weight.shape
    out_dtype = weight.dtype

    # threshold resolution hoisted out of the kernel; |w|.max() is only needed
    # when weight_range <= 0, so gate it with lax.cond and skip the extra HBM
    # pass in the common post-calibration case.
    wr = weight_range.astype(jnp.float32)[0]
    thr = lax.cond(wr <= 0.0,
                   lambda: jnp.max(jnp.abs(weight.astype(jnp.float32))),
                   lambda: wr)
    if w_bit > 1:
        sf = thr / (2.0 ** (w_bit - 1) - 1.0)
        inv_sf = jnp.where(sf == 0.0, 0.0, 1.0 / sf)   # all-zero weight guard
    else:
        sf = jnp.mean(jnp.abs(weight.astype(jnp.float32)))
        inv_sf = jnp.zeros((), jnp.float32)
    params = jnp.stack([thr, sf, inv_sf])              # (3,) SMEM scalars

    itemsize = jnp.dtype(out_dtype).itemsize
    tco = _pick_row_tile(Co, Ci, itemsize, block_budget_bytes)
    grid = (pl.cdiv(Co, tco),)

    kernel = functools.partial(_weight_quant_kernel, w_bit=w_bit)
    wq = pl.pallas_call(
        kernel,
        out_shape=jax.ShapeDtypeStruct((Co, Ci), out_dtype),
        grid=grid,
        in_specs=[
            pl.BlockSpec(memory_space=pltpu.MemorySpace.SMEM),   # [thr, sf, inv_sf]
            pl.BlockSpec((tco, Ci), lambda i: (i, 0)),           # weight tile
        ],
        out_specs=pl.BlockSpec((tco, Ci), lambda i: (i, 0)),
        compiler_params=pltpu.CompilerParams(
            dimension_semantics=("parallel",),
            vmem_limit_bytes=_VMEM_LIMIT_BYTES),
    )(params, weight)                                  # no dtype cast: native HBM I/O
    return wq, thr.reshape(1)


# ----------------------------- QModule._quantize ---------------------------
def qmodule_quantize(inputs, weight, bias, groups_range1, alpha_activ,
                     weight_range,
                     act_block_budget_bytes=_DEFAULT_BLOCK_BUDGET,
                     w_block_budget_bytes=_DEFAULT_BLOCK_BUDGET):
    """Pallas implementation of QModule._quantize (inference / non-calibrate path)."""
    # TODO(synk): calibration path (_compute_threshold / find_scale_by_percentile /
    # two_groups) is host-side numpy histogram logic, not part of the TPU hot path.
    x_q = quantize_activation(inputs, groups_range1, alpha_activ,
                              block_budget_bytes=act_block_budget_bytes)
    w_q, new_weight_range = quantize_weight(
        weight, weight_range, block_budget_bytes=w_block_budget_bytes)
    return x_q, w_q, bias, new_weight_range


# --------------------------------- reference --------------------------------
def _reference(inputs, weight, groups_range1, alpha_activ, weight_range,
               a_bit=A_BIT, w_bit=W_BIT):
    x = inputs.astype(jnp.float32)
    sw = jax.nn.softmax(alpha_activ.astype(jnp.float32), axis=0)
    denom = 2.0 ** a_bit - 1.0
    acc = jnp.zeros_like(x)
    for g in range(groups_range1.shape[0]):
        r = groups_range1[g].astype(jnp.float32)
        sf = r / denom
        inv_sf = jnp.where(r == 0.0, 0.0, denom / r)
        ori = jnp.clip(x, 0.0, r)                        # == 0.5*(|x|-|x-r|+r), r>=0
        q = jnp.where(r == 0.0, 0.0, jnp.round(ori * inv_sf) * sf)
        acc = acc + q * sw[g]
    w = weight.astype(jnp.float32)
    thr = jnp.where(weight_range[0] <= 0.0, jnp.max(jnp.abs(w)), weight_range[0])
    sf = thr / (2.0 ** (w_bit - 1) - 1.0)
    inv_sf = jnp.where(sf == 0.0, 0.0, 1.0 / sf)
    wq = jnp.round(jnp.clip(w, -thr, thr) * inv_sf) * sf
    return acc, wq


if __name__ == "__main__":
    key = jax.random.PRNGKey(0)
    k_x, k_w, k_b = jax.random.split(key, 3)

    # small test shapes: C = 192 (module default) exercises the lane-padding
    # path; N = 100 / C_OUT = 60 exercise ragged (cdiv) grids.
    B, N, C = 2, 100, DIM
    C_OUT = 60

    inputs = jax.random.normal(k_x, (B, N, C), dtype=jnp.float32) * 3.0
    weight = jax.random.normal(k_w, (C_OUT, C), dtype=jnp.float32) * 0.1
    bias = jax.random.normal(k_b, (C_OUT,), dtype=jnp.float32) * 0.01

    # deterministic synthetic parameters (shapes from QModule.__init__):
    #   groups_range1: (group_n,) -- zero-init in the module; nonzero ranges
    #   (plus one zero) exercise both the active and the disabled-branch paths.
    groups_range1 = jnp.array([0.0, 3.0, 6.0], dtype=jnp.float32)        # (GROUP_N,)
    alpha_activ = jnp.full((GROUP_N, DIM), 0.01, dtype=jnp.float32)      # as in __init__
    weight_range = jnp.array([-1.0], dtype=jnp.float32)                  # as in __init__

    # tiny block budgets in the test so the grids are multi-step *and* ragged
    # (prod default is ~2 MiB / block -> ~4K rows at C=128 f32).
    x_q, w_q, b_out, new_wr = qmodule_quantize(
        inputs, weight, bias, groups_range1, alpha_activ, weight_range,
        act_block_budget_bytes=64 * 1024, w_block_budget_bytes=8 * 1024)
    jax.block_until_ready((x_q, w_q, b_out, new_wr))

    x_ref, w_ref = _reference(inputs, weight, groups_range1, alpha_activ,
                              weight_range)
    assert x_q.dtype == inputs.dtype and w_q.dtype == weight.dtype
    assert jnp.allclose(x_q, x_ref, atol=1e-5, rtol=1e-5), "activation mismatch"
    assert jnp.allclose(w_q, w_ref, atol=1e-6, rtol=1e-5), "weight mismatch"
    assert jnp.allclose(b_out, bias), "bias must pass through unchanged"
    assert jnp.allclose(new_wr[0], jnp.max(jnp.abs(weight)), rtol=1e-6), "threshold mismatch"

    # positive-threshold branch (lax.cond gating: no |w|.max() HBM pass taken)
    wr_pos = jnp.array([0.2], dtype=jnp.float32)
    w_q2, new_wr2 = quantize_weight(weight, wr_pos, block_budget_bytes=8 * 1024)
    jax.block_until_ready((w_q2, new_wr2))
    _, w_ref2 = _reference(inputs, weight, groups_range1, alpha_activ, wr_pos)
    assert jnp.allclose(w_q2, w_ref2, atol=1e-6, rtol=1e-5), "weight (wr>0) mismatch"
    assert jnp.allclose(new_wr2[0], wr_pos[0]), "threshold passthrough mismatch"

    print("KERNEL_OK")
</pallas_src>

<mosaic_0001>
module attributes {stable_mosaic.version = 11 : i64} {
  func.func @_act_quant_kernel(%arg0: i32, %arg1: memref<3xf32, #tpu.memory_space<smem>>, %arg2: memref<3xf32, #tpu.memory_space<smem>>, %arg3: memref<64x256xf32, #tpu.memory_space<vmem>>, %arg4: memref<3x256xf32, #tpu.memory_space<vmem>>, %arg5: memref<64x256xf32, #tpu.memory_space<vmem>>) attributes {dimension_semantics = [#tpu.dimension_semantics<parallel>], iteration_bounds = array<i64: 4>, scalar_prefetch = 0 : i64, scratch_operands = 0 : i64, tpu.core_type = #tpu.core_type<tc>, window_params = [{transform_indices = @transform_0, window_bounds = array<i64: 3>}, {transform_indices = @transform_1, window_bounds = array<i64: 3>}, {transform_indices = @transform_2, window_bounds = array<i64: 64, 256>}, {pipeline_mode = #tpu.pipeline_mode<synchronous>, transform_indices = @transform_3, window_bounds = array<i64: 3, 256>}, {transform_indices = @transform_4, window_bounds = array<i64: 64, 256>}]} {
    %c0 = arith.constant 0 : index
    %c0_0 = arith.constant 0 : index
    %0 = vector.load %arg3[%c0, %c0_0] : memref<64x256xf32, #tpu.memory_space<vmem>>, vector<64x256xf32>
    %cst = arith.constant 0.000000e+00 : f32
    %1 = vector.broadcast %cst : f32 to vector<64x256xf32>
    %2 = arith.maximumf %0, %1 : vector<64x256xf32>
    %c0_1 = arith.constant 0 : index
    %3 = memref.load %arg1[%c0_1] : memref<3xf32, #tpu.memory_space<smem>>
    %c0_2 = arith.constant 0 : index
    %4 = memref.load %arg2[%c0_2] : memref<3xf32, #tpu.memory_space<smem>>
    %5 = vector.broadcast %3 : f32 to vector<64x256xf32>
    %6 = arith.minimumf %2, %5 : vector<64x256xf32>
    %7 = vector.broadcast %4 : f32 to vector<64x256xf32>
    %8 = arith.mulf %6, %7 : vector<64x256xf32>
    %9 = math.roundeven %8 : vector<64x256xf32>
    %c0_3 = arith.constant 0 : index
    %c0_4 = arith.constant 0 : index
    %10 = vector.load %arg4[%c0_3, %c0_4] : memref<3x256xf32, #tpu.memory_space<vmem>>, vector<1x256xf32>
    %11 = vector.shape_cast %10 : vector<1x256xf32> to vector<256xf32>
    %12 = vector.shape_cast %11 : vector<256xf32> to vector<1x256xf32>
    %13 = vector.broadcast %12 : vector<1x256xf32> to vector<64x256xf32>
    %14 = arith.mulf %9, %13 : vector<64x256xf32>
    %c1 = arith.constant 1 : index
    %15 = memref.load %arg1[%c1] : memref<3xf32, #tpu.memory_space<smem>>
    %c1_5 = arith.constant 1 : index
    %16 = memref.load %arg2[%c1_5] : memref<3xf32, #tpu.memory_space<smem>>
    %17 = vector.broadcast %15 : f32 to vector<64x256xf32>
    %18 = arith.minimumf %2, %17 : vector<64x256xf32>
    %19 = vector.broadcast %16 : f32 to vector<64x256xf32>
    %20 = arith.mulf %18, %19 : vector<64x256xf32>
    %21 = math.roundeven %20 : vector<64x256xf32>
    %c1_6 = arith.constant 1 : index
    %c0_7 = arith.constant 0 : index
    %22 = vector.load %arg4[%c1_6, %c0_7] : memref<3x256xf32, #tpu.memory_space<vmem>>, vector<1x256xf32>
    %23 = vector.shape_cast %22 : vector<1x256xf32> to vector<256xf32>
    %24 = vector.shape_cast %23 : vector<256xf32> to vector<1x256xf32>
    %25 = vector.broadcast %24 : vector<1x256xf32> to vector<64x256xf32>
    %26 = arith.mulf %21, %25 : vector<64x256xf32>
    %27 = arith.addf %14, %26 : vector<64x256xf32>
    %c2 = arith.constant 2 : index
    %28 = memref.load %arg1[%c2] : memref<3xf32, #tpu.memory_space<smem>>
    %c2_8 = arith.constant 2 : index
    %29 = memref.load %arg2[%c2_8] : memref<3xf32, #tpu.memory_space<smem>>
    %30 = vector.broadcast %28 : f32 to vector<64x256xf32>
    %31 = arith.minimumf %2, %30 : vector<64x256xf32>
    %32 = vector.broadcast %29 : f32 to vector<64x256xf32>
    %33 = arith.mulf %31, %32 : vector<64x256xf32>
    %34 = math.roundeven %33 : vector<64x256xf32>
    %c2_9 = arith.constant 2 : index
    %c0_10 = arith.constant 0 : index
    %35 = vector.load %arg4[%c2_9, %c0_10] : memref<3x256xf32, #tpu.memory_space<vmem>>, vector<1x256xf32>
    %36 = vector.shape_cast %35 : vector<1x256xf32> to vector<256xf32>
    %37 = vector.shape_cast %36 : vector<256xf32> to vector<1x256xf32>
    %38 = vector.broadcast %37 : vector<1x256xf32> to vector<64x256xf32>
    %39 = arith.mulf %34, %38 : vector<64x256xf32>
    %40 = arith.addf %27, %39 : vector<64x256xf32>
    %c0_11 = arith.constant 0 : index
    %c0_12 = arith.constant 0 : index
    %41 = vector.load %arg5[%c0_11, %c0_12] : memref<64x256xf32, #tpu.memory_space<vmem>>, vector<64x256xf32>
    tpu.vector_store %arg5[%c0_11, %c0_12], %40 {strides = array<i32>} : memref<64x256xf32, #tpu.memory_space<vmem>>, vector<64x256xf32>,
    return
  }
  func.func @transform_0(%arg0: i32) -> i32 {
    %c0_i32 = arith.constant 0 : i32
    %c0_i32_0 = arith.constant 0 : i32
    return %c0_i32 : i32
  }
  func.func @transform_1(%arg0: i32) -> i32 {
    %c0_i32 = arith.constant 0 : i32
    %c0_i32_0 = arith.constant 0 : i32
    return %c0_i32 : i32
  }
  func.func @transform_2(%arg0: i32) -> (i32, i32) {
    %c0_i32 = arith.constant 0 : i32
    %c0_i32_0 = arith.constant 0 : i32
    return %arg0, %c0_i32 : i32, i32
  }
  func.func @transform_3(%arg0: i32) -> (i32, i32) {
    %c0_i32 = arith.constant 0 : i32
    %c0_i32_0 = arith.constant 0 : i32
    %c0_i32_1 = arith.constant 0 : i32
    return %c0_i32, %c0_i32_0 : i32, i32
  }
  func.func @transform_4(%arg0: i32) -> (i32, i32) {
    %c0_i32 = arith.constant 0 : i32
    %c0_i32_0 = arith.constant 0 : i32
    return %arg0, %c0_i32 : i32, i32
  }
}

</mosaic_0001>

<llo_original>
// kernel: tpu_custom_call.1
$region0: #{tpu_custom_call.1}
  #allocation0 [shape = 'u32[]', space=smem, size = 0x4, offset = 0x4, fixed_abs, tag = 'smem constant byte address 0x4 - core index']
  #allocation1 [shape = 'u32[144,128]{1,0:T(1,128)}', space=vmem, size = 0x12000, scoped, tag = 'internal scratch']
  %s0 = inlined_call_operand.hbm [shape: f32[3], index: 0, kind: input, shape index: {}]
  %s1 = inlined_call_operand.vmem [shape: f32[3], index: 1, kind: input, shape index: {}]
  %s2 = inlined_call_operand.hbm [shape: f32[200,256], index: 2, kind: input, shape index: {}]
  %s3 = inlined_call_operand.vmem [shape: f32[3,256], index: 3, kind: input, shape index: {}]
  %s4 = inlined_call_operand.hbm [shape: f32[200,256], index: 4, kind: output, shape index: {}]
  %s5 = sld [smem:[#allocation0]]
  $region61: #{tpu_custom_call.1} parent=0
    _
  %s7 = ssub.s32 1, %s5
  %s8 = scalar_select 0, %s7, %s5
  $region1: #{tpu_custom_call.1} parent=0
    #allocation2 [shape = 'u8[512]{0}', space=smem, size = 0x200, scoped, tag = 'input window, operand 0, single buffered']
    #allocation3 [shape = 's32[2]{0}', space=sflag, size = 0x8, scoped, tag = 'scoped memory for tpu_custom_call.1']
    #allocation4 [shape = 's32[2]{0}', space=sflag, size = 0x8, scoped, tag = 'scoped memory for tpu_custom_call.1']
    #allocation5 [shape = 's32[2]{0}', space=sflag, size = 0x8, scoped, tag = 'scoped memory for tpu_custom_call.1']
    #allocation6 [shape = 's32[2]{0}', space=sflag, size = 0x8, scoped, tag = 'scoped memory for tpu_custom_call.1']
    #allocation7 [shape = 'u8[512]{0}', space=smem, size = 0x200, scoped, tag = 'input window, operand 1, single buffered']
    #allocation8 [shape = 'u8[131072]{0}', space=vmem, size = 0x20000, scoped, tag = 'input window, operand 2']
    #allocation9 [shape = 'u8[131072]{0}', space=vmem, size = 0x20000, scoped, tag = 'output window, operand 0']
    %9 = vsyncpa [#allocation5], 0
    %10 = vsyncpa [#allocation6], 0
    %11 = vsyncpa [#allocation3], 0
    %s12 = scalar_lea.sflag [#allocation3], 1
    %13 = vsyncpa %s12, 0
    %14 = vsyncpa [#allocation4], 0
    %s15 = scalar_lea.sflag [#allocation4], 1
    %16 = vsyncpa %s15, 0
    loop: start=0, step=1, limit=6
    $region2: #{tpu_custom_call.1} parent=1 // loop_pre_header
      _
    $region3: #{tpu_custom_call.1} parent=1 // loop_header
      %s18 = sphi 0, %s22
      %p19 = scmp.ge.s32.totalorder %s18, 6
      %s26 = sphi 0, %s26
      %s28 = sphi 0, %s26
      %s29 = sphi 0, %s28
      %s43 = sphi 0, %s29
      %s47 = sphi 0, %s47
      %s49 = sphi 0, %s47
      %s50 = sphi 0, %s49
      %s64 = sphi 0, %s50
      %s70 = sphi 0, %s72
      %s73 = sphi 0, %s70
      %s74 = sphi 0, %s73
      %s90 = sphi 0, %s74
      %s94 = sphi 0, %s94
      %s96 = sphi 0, %s94
      %s97 = sphi 0, %s96
      %s111 = sphi 0, %s97
      %s117 = sphi 0, %s119
      %s120 = sphi 0, %s117
      %s121 = sphi 0, %s120
      %s137 = sphi 0, %s121
    $region4: #{tpu_custom_call.1} parent=1 // loop_header_branch
      %21 = sbr.rel (%p19) target = $region8
    $region5: #{tpu_custom_call.1} parent=1 // loop_body
      %s23 = ssub.s32 %s18, 1
      %s24 = ssub.s32 %s18, 2
      %s25 = sadd.s32 %s18, 1
      %s27 = sadd.s32 %s26, 1
      %p30 = scmp.eq.s32.totalorder %s18, 3
      %p31 = scmp.ne.s32.totalorder %s26, %s28
      %p32 = scmp.eq.s32.totalorder %s18, 0
      %p33 = por %p31, %p32
      %p34 = scmp.ne.s32.totalorder %s26, %s28
      %p35 = scmp.eq.s32.totalorder %s23, 3
      %p36 = por %p34, %p35
      %p37 = scmp.ne.s32.totalorder %s28, %s29
      %p38 = scmp.eq.s32.totalorder %s23, 0
      %p39 = por %p37, %p38
      %p40 = scmp.ne.s32.totalorder %s28, %s29
      %p41 = scmp.eq.s32.totalorder %s24, 3
      %p42 = por %p40, %p41
      %p44 = scmp.ne.s32.totalorder %s29, %s43
      %p45 = scmp.eq.s32.totalorder %s24, 0
      %p46 = por %p44, %p45
      %s48 = sadd.s32 %s47, 1
      %p51 = scmp.eq.s32.totalorder %s18, 3
      %p52 = scmp.ne.s32.totalorder %s47, %s49
      %p53 = scmp.eq.s32.totalorder %s18, 0
      %p54 = por %p52, %p53
      %p55 = scmp.ne.s32.totalorder %s47, %s49
      %p56 = scmp.eq.s32.totalorder %s23, 3
      %p57 = por %p55, %p56
      %p58 = scmp.ne.s32.totalorder %s49, %s50
      %p59 = scmp.eq.s32.totalorder %s23, 0
      %p60 = por %p58, %p59
      %p61 = scmp.ne.s32.totalorder %s49, %s50
      %p62 = scmp.eq.s32.totalorder %s24, 3
      %p63 = por %p61, %p62
      %p65 = scmp.ne.s32.totalorder %s50, %s64
      %p66 = scmp.eq.s32.totalorder %s24, 0
      %p67 = por %p65, %p66
      %s68 = ssub.s32 %s18, %s25
      %p69 = scmp.eq.s32.totalorder %s68, 0
      %s71 = sadd.s32 %s70, 1
      %s72 = scalar_select %p69, %s70, %s71
      %p75 = pneg %p69
      %p76 = scmp.eq.s32.totalorder %s18, 3
      %p77 = por %p75, %p76
      %p78 = scmp.ne.s32.totalorder %s70, %s73
      %p79 = scmp.eq.s32.totalorder %s18, 0
      %p80 = por %p78, %p79
      %p81 = scmp.ne.s32.totalorder %s70, %s73
      %p82 = scmp.eq.s32.totalorder %s23, 3
      %p83 = por %p81, %p82
      %p84 = scmp.ne.s32.totalorder %s73, %s74
      %p85 = scmp.eq.s32.totalorder %s23, 0
      %p86 = por %p84, %p85
      %p87 = scmp.ne.s32.totalorder %s73, %s74
      %p88 = scmp.eq.s32.totalorder %s24, 3
      %p89 = por %p87, %p88
      %p91 = scmp.ne.s32.totalorder %s74, %s90
      %p92 = scmp.eq.s32.totalorder %s24, 0
      %p93 = por %p91, %p92
      %s95 = sadd.s32 %s94, 1
      %p98 = scmp.eq.s32.totalorder %s18, 3
      %p99 = scmp.ne.s32.totalorder %s94, %s96
      %p100 = scmp.eq.s32.totalorder %s18, 0
      %p101 = por %p99, %p100
      %p102 = scmp.ne.s32.totalorder %s94, %s96
      %p103 = scmp.eq.s32.totalorder %s23, 3
      %p104 = por %p102, %p103
      %p105 = scmp.ne.s32.totalorder %s96, %s97
      %p106 = scmp.eq.s32.totalorder %s23, 0
      %p107 = por %p105, %p106
      %p108 = scmp.ne.s32.totalorder %s96, %s97
      %p109 = scmp.eq.s32.totalorder %s24, 3
      %p110 = por %p108, %p109
      %p112 = scmp.ne.s32.totalorder %s97, %s111
      %p113 = scmp.eq.s32.totalorder %s24, 0
      %p114 = por %p112, %p113
      %s115 = ssub.s32 %s18, %s25
      %p116 = scmp.eq.s32.totalorder %s115, 0
      %s118 = sadd.s32 %s117, 1
      %s119 = scalar_select %p116, %s117, %s118
      %p122 = pneg %p116
      %p123 = scmp.eq.s32.totalorder %s18, 3
      %p124 = por %p122, %p123
      %p125 = scmp.ne.s32.totalorder %s117, %s120
      %p126 = scmp.eq.s32.totalorder %s18, 0
      %p127 = por %p125, %p126
      %p128 = scmp.ne.s32.totalorder %s117, %s120
      %p129 = scmp.eq.s32.totalorder %s23, 3
      %p130 = por %p128, %p129
      %p131 = scmp.ne.s32.totalorder %s120, %s121
      %p132 = scmp.eq.s32.totalorder %s23, 0
      %p133 = por %p131, %p132
      %p134 = scmp.ne.s32.totalorder %s120, %s121
      %p135 = scmp.eq.s32.totalorder %s24, 3
      %p136 = por %p134, %p135
      %p138 = scmp.ne.s32.totalorder %s121, %s137
      %p139 = scmp.eq.s32.totalorder %s24, 0
      %p140 = por %p138, %p139
      %p141 = scmp.le.s32.totalorder 1, %s18
      %p142 = scmp.lt.s32.totalorder %s18, 5
      %p143 = pnand %p141, %p142
      %p144 = pneg %p143
      // Predicated region
      $region9: #{tpu_custom_call.1} parent=5 // pred_check
        _
      $region10: #{tpu_custom_call.1} parent=5 // pred_check_branch
        %146 = sbr.rel (%p143) target = $region12
      $region11: #{tpu_custom_call.1} parent=5 // pred_region
        %s147 = ssub.s32 %s18, 1
        // Predicated region
        $region13: #{tpu_custom_call.1} parent=11 // pred_check
          %p148 = pneg %p39
        $region14: #{tpu_custom_call.1} parent=11 // pred_check_branch
          %150 = sbr.rel (%p148) target = $region16
        $region15: #{tpu_custom_call.1} parent=11 // pred_region
          %s152 = ssub.s32 16, 16
          %153 = vsyncadd [#allocation5], %s152
          %156 = dma.hbm_to_smem %s0, 16, [#allocation2], [#allocation5]
        $region16: #{tpu_custom_call.1} parent=11 // pred_fallthru
          _
        // Predicated region
        $region17: #{tpu_custom_call.1} parent=11 // pred_check
          %p157 = pneg %p60
        $region18: #{tpu_custom_call.1} parent=11 // pred_check_branch
          %159 = sbr.rel (%p157) target = $region20
        $region19: #{tpu_custom_call.1} parent=11 // pred_region
          %s161 = ssub.s32 16, 16
          %162 = vsyncadd [#allocation6], %s161
          %s164 = sshll.u32 %s1, 4
          %s165 = int_to_ptr.vmem [resolvable:$true] %s164
          %167 = dma.vmem_to_smem %s165, 16, [#allocation7], [#allocation6]
        $region20: #{tpu_custom_call.1} parent=11 // pred_fallthru
          _
        // Predicated region
        $region21: #{tpu_custom_call.1} parent=11 // pred_check
          %p168 = pneg %p107
        $region22: #{tpu_custom_call.1} parent=11 // pred_check_branch
          %170 = sbr.rel (%p168) target = $region24
        $region23: #{tpu_custom_call.1} parent=11 // pred_region
          _
        $region24: #{tpu_custom_call.1} parent=11 // pred_fallthru
          _
      $region12: #{tpu_custom_call.1} parent=5 // pred_fallthru
        _
      %p171 = scmp.lt.s32.totalorder %s18, 4
      // Predicated region
      $region25: #{tpu_custom_call.1} parent=5 // pred_check
        %p172 = pneg %p171
      $region26: #{tpu_custom_call.1} parent=5 // pred_check_branch
        %174 = sbr.rel (%p172) target = $region28
      $region27: #{tpu_custom_call.1} parent=5 // pred_region
        // Predicated region
        $region29: #{tpu_custom_call.1} parent=27 // pred_check
          %p175 = pneg %p80
        $region30: #{tpu_custom_call.1} parent=27 // pred_check_branch
          %177 = sbr.rel (%p175) target = $region32
        $region31: #{tpu_custom_call.1} parent=27 // pred_region
          %s178 = sand.u32 %s70, 1
          %s179 = scalar_lea.sflag [#allocation3], %s178
          %s180 = sand.u32 %s70, 1
          %s181 = smul.addr %s180, 128
          %s182 = scalar_lea.vmem [#allocation8], %s181
          %s183 = smul.u32 8, %s18
          %s184 = ssub.s32 25, %s183
          %p185 = scmp.lt.s32.totalorder %s184, 8
          %s186 = scalar_select %p185, %s184, 8
          %s187 = smul.u32 128, %s186
          %s188 = smul.u32 %s187, 2
          %s190 = ssub.s32 2048, %s188
          %191 = vsyncadd %s179, %s190
          %p192 = scmp.ne.s32.totalorder 0, %s188
          %s193 = smul.addr %s183, 2
          %s194 = smul.addr %s193, 128
          %s195 = scalar_lea.hbm %s2, %s194
          %s196 = smul.u32 16, %s186
          %s197 = sshll.u32 %s182, 4
          %s198 = int_to_ptr.vmem [resolvable:$true] %s197
          %s199 = sshll.u32 %s196, 4
          %203 = dma.hbm_to_vmem [thread:$0]  (%p192), %s195, %s199, %s198, %s179, 256, 256, 16
        $region32: #{tpu_custom_call.1} parent=27 // pred_fallthru
          _
      $region28: #{tpu_custom_call.1} parent=5 // pred_fallthru
        _
      %p204 = scmp.le.s32.totalorder 1, %s18
      %p205 = scmp.lt.s32.totalorder %s18, 5
      %p206 = pnand %p204, %p205
      %p207 = pneg %p206
      // Predicated region
      $region33: #{tpu_custom_call.1} parent=5 // pred_check
        _
      $region34: #{tpu_custom_call.1} parent=5 // pred_check_branch
        %209 = sbr.rel (%p206) target = $region36
      $region35: #{tpu_custom_call.1} parent=5 // pred_region
        %s210 = ssub.s32 %s18, 1
        // Predicated region
        $region37: #{tpu_custom_call.1} parent=35 // pred_check
          %p211 = pneg %p39
        $region38: #{tpu_custom_call.1} parent=35 // pred_check_branch
          %213 = sbr.rel (%p211) target = $region40
        $region39: #{tpu_custom_call.1} parent=35 // pred_region
          %214 = dma.done [#allocation5], 16
        $region40: #{tpu_custom_call.1} parent=35 // pred_fallthru
          _
        // Predicated region
        $region41: #{tpu_custom_call.1} parent=35 // pred_check
          %p215 = pneg %p60
        $region42: #{tpu_custom_call.1} parent=35 // pred_check_branch
          %217 = sbr.rel (%p215) target = $region44
        $region43: #{tpu_custom_call.1} parent=35 // pred_region
          %218 = dma.done [#allocation6], 16
        $region44: #{tpu_custom_call.1} parent=35 // pred_fallthru
          _
        %s219 = sand.u32 %s73, 1
        %s220 = scalar_lea.sflag [#allocation3], %s219
        %s221 = sand.u32 %s73, 1
        %s222 = smul.addr %s221, 128
        %s223 = scalar_lea.vmem [#allocation8], %s222
        // Predicated region
        $region45: #{tpu_custom_call.1} parent=35 // pred_check
          %p224 = pneg %p86
        $region46: #{tpu_custom_call.1} parent=35 // pred_check_branch
          %226 = sbr.rel (%p224) target = $region48
        $region47: #{tpu_custom_call.1} parent=35 // pred_region
          %227 = dma.done %s220, 2048
        $region48: #{tpu_custom_call.1} parent=35 // pred_fallthru
          _
        %228 = sfence
        %p229 = pneg %p39
        %p230 = pneg %p36
        %p231 = pneg %p60
        %p232 = pneg %p57
        %s233 = sand.u32 %s73, 1
        %s234 = scalar_lea.sflag [#allocation3], %s233
        %s235 = sand.u32 %s73, 1
        %s236 = smul.addr %s235, 128
        %s237 = scalar_lea.vmem [#allocation8], %s236
        %p238 = pneg %p86
        %p239 = pneg %p83
        %p240 = pneg %p107
        %p241 = pneg %p104
        %p242 = pneg %p133
        %p243 = pneg %p130
        %s244 = sand.u32 %s120, 1
        %s245 = scalar_lea.sflag [#allocation4], %s244
        %s246 = sand.u32 %s120, 1
        %s247 = smul.addr %s246, 128
        %s248 = scalar_lea.vmem [#allocation9], %s247
        %s249 = smul.u32 8, %s23
        %s250 = ssub.s32 25, %s249
        %p251 = scmp.lt.s32.totalorder %s250, 8
        %s252 = scalar_select %p251, %s250, 8
        %s253 = smul.u32 128, %s252
        %s254 = smul.u32 %s253, 2
        %s255 = smul.u32 8, %s23
        %s256 = ssub.s32 25, %s255
        %p257 = scmp.lt.s32.totalorder %s256, 8
        %s258 = scalar_select %p257, %s256, 8
        %s259 = smul.u32 128, %s258
        %s260 = smul.u32 %s259, 2
        %v261 = vld [vmem:[%s223] sm:$0xff]
        %v262 = vld [vmem:[%s223 + $0x8] sm:$0xff]
        %v263 = vld [vmem:[%s223 + $0x10] sm:$0xff]
        %v264 = vld [vmem:[%s223 + $0x18] sm:$0xff]
        %v265 = vld [vmem:[%s223 + $0x20] sm:$0xff]
        %v266 = vld [vmem:[%s223 + $0x28] sm:$0xff]
        %v267 = vld [vmem:[%s223 + $0x30] sm:$0xff]
        %v268 = vld [vmem:[%s223 + $0x38] sm:$0xff]
        %v269 = vld [vmem:[%s223 + $0x40] sm:$0xff]
        %v270 = vld [vmem:[%s223 + $0x48] sm:$0xff]
        %v271 = vld [vmem:[%s223 + $0x50] sm:$0xff]
        %v272 = vld [vmem:[%s223 + $0x58] sm:$0xff]
        %v273 = vld [vmem:[%s223 + $0x60] sm:$0xff]
        %v274 = vld [vmem:[%s223 + $0x68] sm:$0xff]
        %v275 = vld [vmem:[%s223 + $0x70] sm:$0xff]
        %v276 = vld [vmem:[%s223 + $0x78] sm:$0xff]
        %v277 = vmax.f32 %v261, 0.0
        %v278 = vmax.f32 %v262, 0.0
        %v279 = vmax.f32 %v263, 0.0
        %v280 = vmax.f32 %v264, 0.0
        %v281 = vmax.f32 %v265, 0.0
        %v282 = vmax.f32 %v266, 0.0
        %v283 = vmax.f32 %v267, 0.0
        %v284 = vmax.f32 %v268, 0.0
        %v285 = vmax.f32 %v269, 0.0
        %v286 = vmax.f32 %v270, 0.0
        %v287 = vmax.f32 %v271, 0.0
        %v288 = vmax.f32 %v272, 0.0
        %v289 = vmax.f32 %v273, 0.0
        %v290 = vmax.f32 %v274, 0.0
        %v291 = vmax.f32 %v275, 0.0
        %v292 = vmax.f32 %v276, 0.0
        %s293 = sld [smem:[#allocation2]]
        %s294 = sld [smem:[#allocation7]]
        %v295 = vstv %s293
        %v296 = vmin.f32 %v277, %v295
        %v297 = vmin.f32 %v278, %v295
        %v298 = vmin.f32 %v279, %v295
        %v299 = vmin.f32 %v280, %v295
        %v300 = vmin.f32 %v281, %v295
        %v301 = vmin.f32 %v282, %v295
        %v302 = vmin.f32 %v283, %v295
        %v303 = vmin.f32 %v284, %v295
        %v304 = vmin.f32 %v285, %v295
        %v305 = vmin.f32 %v286, %v295
        %v306 = vmin.f32 %v287, %v295
        %v307 = vmin.f32 %v288, %v295
        %v308 = vmin.f32 %v289, %v295
        %v309 = vmin.f32 %v290, %v295
        %v310 = vmin.f32 %v291, %v295
        %v311 = vmin.f32 %v292, %v295
        %v312 = vstv %s294
        %v313 = vmul.f32 %v296, %v312
        %v314 = vmul.f32 %v297, %v312
        %v315 = vmul.f32 %v298, %v312
        %v316 = vmul.f32 %v299, %v312
        %v317 = vmul.f32 %v300, %v312
        %v318 = vmul.f32 %v301, %v312
        %v319 = vmul.f32 %v302, %v312
        %v320 = vmul.f32 %v303, %v312
        %v321 = vmul.f32 %v304, %v312
        %v322 = vmul.f32 %v305, %v312
        %v323 = vmul.f32 %v306, %v312
        %v324 = vmul.f32 %v307, %v312
        %v325 = vmul.f32 %v308, %v312
        %v326 = vmul.f32 %v309, %v312
        %v327 = vmul.f32 %v310, %v312
        %v328 = vmul.f32 %v311, %v312
        %v329 = vround.ne.pseudo %v313
        %v330 = vround.ne.pseudo %v314
        %v331 = vround.ne.pseudo %v315
        %v332 = vround.ne.pseudo %v316
        %v333 = vround.ne.pseudo %v317
        %v334 = vround.ne.pseudo %v318
        %v335 = vround.ne.pseudo %v319
        %v336 = vround.ne.pseudo %v320
        %v337 = vround.ne.pseudo %v321
        %v338 = vround.ne.pseudo %v322
        %v339 = vround.ne.pseudo %v323
        %v340 = vround.ne.pseudo %v324
        %v341 = vround.ne.pseudo %v325
        %v342 = vround.ne.pseudo %v326
        %v343 = vround.ne.pseudo %v327
        %v344 = vround.ne.pseudo %v328
        %v345 = vld [vmem:[%s3] ss:$4 sm:$0x3]
        %v347 = vlaneseq
        %v348 = vshrl.u32 %v347, 7
        %v349 = vsub.s32 0, %v348
        %v350 = vrot.slane %v345, %v349
        %v351 = vlaneseq
        %v352 = vshrl.u32 %v351, 7
        %v353 = vsub.s32 1, %v352
        %v354 = vrot.slane %v345, %v353
        %v357 = vmul.f32 %v329, %v350
        %v358 = vmul.f32 %v330, %v354
        %v359 = vmul.f32 %v331, %v350
        %v360 = vmul.f32 %v332, %v354
        %v361 = vmul.f32 %v333, %v350
        %v362 = vmul.f32 %v334, %v354
        %v363 = vmul.f32 %v335, %v350
        %v364 = vmul.f32 %v336, %v354
        %v365 = vmul.f32 %v337, %v350
        %v366 = vmul.f32 %v338, %v354
        %v367 = vmul.f32 %v339, %v350
        %v368 = vmul.f32 %v340, %v354
        %v369 = vmul.f32 %v341, %v350
        %v370 = vmul.f32 %v342, %v354
        %v371 = vmul.f32 %v343, %v350
        %v372 = vmul.f32 %v344, %v354
        %s373 = sld [smem:[#allocation2 + $0x1]]
        %s374 = sld [smem:[#allocation7 + $0x1]]
        %v375 = vstv %s373
        %v376 = vmin.f32 %v277, %v375
        %v377 = vmin.f32 %v278, %v375
        %v378 = vmin.f32 %v279, %v375
        %v379 = vmin.f32 %v280, %v375
        %v380 = vmin.f32 %v281, %v375
        %v381 = vmin.f32 %v282, %v375
        %v382 = vmin.f32 %v283, %v375
        %v383 = vmin.f32 %v284, %v375
        %v384 = vmin.f32 %v285, %v375
        %v385 = vmin.f32 %v286, %v375
        %v386 = vmin.f32 %v287, %v375
        %v387 = vmin.f32 %v288, %v375
        %v388 = vmin.f32 %v289, %v375
        %v389 = vmin.f32 %v290, %v375
        %v390 = vmin.f32 %v291, %v375
        %v391 = vmin.f32 %v292, %v375
        %v392 = vstv %s374
        %v393 = vmul.f32 %v376, %v392
        %v394 = vmul.f32 %v377, %v392
        %v395 = vmul.f32 %v378, %v392
        %v396 = vmul.f32 %v379, %v392
        %v397 = vmul.f32 %v380, %v392
        %v398 = vmul.f32 %v381, %v392
        %v399 = vmul.f32 %v382, %v392
        %v400 = vmul.f32 %v383, %v392
        %v401 = vmul.f32 %v384, %v392
        %v402 = vmul.f32 %v385, %v392
        %v403 = vmul.f32 %v386, %v392
        %v404 = vmul.f32 %v387, %v392
        %v405 = vmul.f32 %v388, %v392
        %v406 = vmul.f32 %v389, %v392
        %v407 = vmul.f32 %v390, %v392
        %v408 = vmul.f32 %v391, %v392
        %v409 = vround.ne.pseudo %v393
        %v410 = vround.ne.pseudo %v394
        %v411 = vround.ne.pseudo %v395
        %v412 = vround.ne.pseudo %v396
        %v413 = vround.ne.pseudo %v397
        %v414 = vround.ne.pseudo %v398
        %v415 = vround.ne.pseudo %v399
        %v416 = vround.ne.pseudo %v400
        %v417 = vround.ne.pseudo %v401
        %v418 = vround.ne.pseudo %v402
        %v419 = vround.ne.pseudo %v403
        %v420 = vround.ne.pseudo %v404
        %v421 = vround.ne.pseudo %v405
        %v422 = vround.ne.pseudo %v406
        %v423 = vround.ne.pseudo %v407
        %v424 = vround.ne.pseudo %v408
        %s425 = scalar_lea.vmem %s3, 1
        %v426 = vld [vmem:[%s425] ss:$4 sm:$0x3]
        %v428 = vlaneseq
        %v429 = vshrl.u32 %v428, 7
        %v430 = vsub.s32 0, %v429
        %v431 = vrot.slane %v426, %v430
        %v432 = vlaneseq
        %v433 = vshrl.u32 %v432, 7
        %v434 = vsub.s32 1, %v433
        %v435 = vrot.slane %v426, %v434
        %v438 = vmul.f32 %v409, %v431
        %v439 = vmul.f32 %v410, %v435
        %v440 = vmul.f32 %v411, %v431
        %v441 = vmul.f32 %v412, %v435
        %v442 = vmul.f32 %v413, %v431
        %v443 = vmul.f32 %v414, %v435
        %v444 = vmul.f32 %v415, %v431
        %v445 = vmul.f32 %v416, %v435
        %v446 = vmul.f32 %v417, %v431
        %v447 = vmul.f32 %v418, %v435
        %v448 = vmul.f32 %v419, %v431
        %v449 = vmul.f32 %v420, %v435
        %v450 = vmul.f32 %v421, %v431
        %v451 = vmul.f32 %v422, %v435
        %v452 = vmul.f32 %v423, %v431
        %v453 = vmul.f32 %v424, %v435
        %v454 = vadd.f32 %v357, %v438
        %v455 = vadd.f32 %v358, %v439
        %v456 = vadd.f32 %v359, %v440
        %v457 = vadd.f32 %v360, %v441
        %v458 = vadd.f32 %v361, %v442
        %v459 = vadd.f32 %v362, %v443
        %v460 = vadd.f32 %v363, %v444
        %v461 = vadd.f32 %v364, %v445
        %v462 = vadd.f32 %v365, %v446
        %v463 = vadd.f32 %v366, %v447
        %v464 = vadd.f32 %v367, %v448
        %v465 = vadd.f32 %v368, %v449
        %v466 = vadd.f32 %v369, %v450
        %v467 = vadd.f32 %v370, %v451
        %v468 = vadd.f32 %v371, %v452
        %v469 = vadd.f32 %v372, %v453
        %s470 = sld [smem:[#allocation2 + $0x2]]
        %s471 = sld [smem:[#allocation7 + $0x2]]
        %v472 = vstv %s470
        %v473 = vmin.f32 %v277, %v472
        %v474 = vmin.f32 %v278, %v472
        %v475 = vmin.f32 %v279, %v472
        %v476 = vmin.f32 %v280, %v472
        %v477 = vmin.f32 %v281, %v472
        %v478 = vmin.f32 %v282, %v472
        %v479 = vmin.f32 %v283, %v472
        %v480 = vmin.f32 %v284, %v472
        %v481 = vmin.f32 %v285, %v472
        %v482 = vmin.f32 %v286, %v472
        %v483 = vmin.f32 %v287, %v472
        %v484 = vmin.f32 %v288, %v472
        %v485 = vmin.f32 %v289, %v472
        %v486 = vmin.f32 %v290, %v472
        %v487 = vmin.f32 %v291, %v472
        %v488 = vmin.f32 %v292, %v472
        %v489 = vstv %s471
        %v490 = vmul.f32 %v473, %v489
        %v491 = vmul.f32 %v474, %v489
        %v492 = vmul.f32 %v475, %v489
        %v493 = vmul.f32 %v476, %v489
        %v494 = vmul.f32 %v477, %v489
        %v495 = vmul.f32 %v478, %v489
        %v496 = vmul.f32 %v479, %v489
        %v497 = vmul.f32 %v480, %v489
        %v498 = vmul.f32 %v481, %v489
        %v499 = vmul.f32 %v482, %v489
        %v500 = vmul.f32 %v483, %v489
        %v501 = vmul.f32 %v484, %v489
        %v502 = vmul.f32 %v485, %v489
        %v503 = vmul.f32 %v486, %v489
        %v504 = vmul.f32 %v487, %v489
        %v505 = vmul.f32 %v488, %v489
        %v506 = vround.ne.pseudo %v490
        %v507 = vround.ne.pseudo %v491
        %v508 = vround.ne.pseudo %v492
        %v509 = vround.ne.pseudo %v493
        %v510 = vround.ne.pseudo %v494
        %v511 = vround.ne.pseudo %v495
        %v512 = vround.ne.pseudo %v496
        %v513 = vround.ne.pseudo %v497
        %v514 = vround.ne.pseudo %v498
        %v515 = vround.ne.pseudo %v499
        %v516 = vround.ne.pseudo %v500
        %v517 = vround.ne.pseudo %v501
        %v518 = vround.ne.pseudo %v502
        %v519 = vround.ne.pseudo %v503
        %v520 = vround.ne.pseudo %v504
        %v521 = vround.ne.pseudo %v505
        %s522 = scalar_lea.vmem %s3, 2
        %v523 = vld [vmem:[%s522] ss:$4 sm:$0x3]
        %v525 = vlaneseq
        %v526 = vshrl.u32 %v525, 7
        %v527 = vsub.s32 0, %v526
        %v528 = vrot.slane %v523, %v527
        %v529 = vlaneseq
        %v530 = vshrl.u32 %v529, 7
        %v531 = vsub.s32 1, %v530
        %v532 = vrot.slane %v523, %v531
        %v535 = vmul.f32 %v506, %v528
        %v536 = vmul.f32 %v507, %v532
        %v537 = vmul.f32 %v508, %v528
        %v538 = vmul.f32 %v509, %v532
        %v539 = vmul.f32 %v510, %v528
        %v540 = vmul.f32 %v511, %v532
        %v541 = vmul.f32 %v512, %v528
        %v542 = vmul.f32 %v513, %v532
        %v543 = vmul.f32 %v514, %v528
        %v544 = vmul.f32 %v515, %v532
        %v545 = vmul.f32 %v516, %v528
        %v546 = vmul.f32 %v517, %v532
        %v547 = vmul.f32 %v518, %v528
        %v548 = vmul.f32 %v519, %v532
        %v549 = vmul.f32 %v520, %v528
        %v550 = vmul.f32 %v521, %v532
        %v551 = vadd.f32 %v454, %v535
        %v552 = vadd.f32 %v455, %v536
        %v553 = vadd.f32 %v456, %v537
        %v554 = vadd.f32 %v457, %v538
        %v555 = vadd.f32 %v458, %v539
        %v556 = vadd.f32 %v459, %v540
        %v557 = vadd.f32 %v460, %v541
        %v558 = vadd.f32 %v461, %v542
        %v559 = vadd.f32 %v462, %v543
        %v560 = vadd.f32 %v463, %v544
        %v561 = vadd.f32 %v464, %v545
        %v562 = vadd.f32 %v465, %v546
        %v563 = vadd.f32 %v466, %v547
        %v564 = vadd.f32 %v467, %v548
        %v565 = vadd.f32 %v468, %v549
        %v566 = vadd.f32 %v469, %v550
        %567 = vst [vmem:[%s248] sm:$0xff] %v551
        %568 = vst [vmem:[%s248 + $0x8] sm:$0xff] %v552
        %569 = vst [vmem:[%s248 + $0x10] sm:$0xff] %v553
        %570 = vst [vmem:[%s248 + $0x18] sm:$0xff] %v554
        %571 = vst [vmem:[%s248 + $0x20] sm:$0xff] %v555
        %572 = vst [vmem:[%s248 + $0x28] sm:$0xff] %v556
        %573 = vst [vmem:[%s248 + $0x30] sm:$0xff] %v557
        %574 = vst [vmem:[%s248 + $0x38] sm:$0xff] %v558
        %575 = vst [vmem:[%s248 + $0x40] sm:$0xff] %v559
        %576 = vst [vmem:[%s248 + $0x48] sm:$0xff] %v560
        %577 = vst [vmem:[%s248 + $0x50] sm:$0xff] %v561
        %578 = vst [vmem:[%s248 + $0x58] sm:$0xff] %v562
        %579 = vst [vmem:[%s248 + $0x60] sm:$0xff] %v563
        %580 = vst [vmem:[%s248 + $0x68] sm:$0xff] %v564
        %581 = vst [vmem:[%s248 + $0x70] sm:$0xff] %v565
        %582 = vst [vmem:[%s248 + $0x78] sm:$0xff] %v566
        %s583 = sand.u32 %s120, 1
        %s584 = scalar_lea.sflag [#allocation4], %s583
        %s585 = sand.u32 %s120, 1
        %s586 = smul.addr %s585, 128
        %s587 = scalar_lea.vmem [#allocation9], %s586
        // Predicated region
        $region49: #{tpu_custom_call.1} parent=35 // pred_check
          %p588 = pneg %p130
        $region50: #{tpu_custom_call.1} parent=35 // pred_check_branch
          %590 = sbr.rel (%p588) target = $region52
        $region51: #{tpu_custom_call.1} parent=35 // pred_region
          %s591 = smul.u32 8, %s23
          %s592 = ssub.s32 25, %s591
          %p593 = scmp.lt.s32.totalorder %s592, 8
          %s594 = scalar_select %p593, %s592, 8
          %s595 = smul.u32 128, %s594
          %s596 = smul.u32 %s595, 2
          %s598 = ssub.s32 2048, %s596
          %599 = vsyncadd %s584, %s598
          %p600 = scmp.ne.s32.totalorder 0, %s596
          %s601 = smul.addr %s591, 2
          %s602 = smul.addr %s601, 128
          %s603 = scalar_lea.hbm %s4, %s602
          %s604 = smul.u32 16, %s594
          %s605 = sshll.u32 %s587, 4
          %s606 = int_to_ptr.vmem [resolvable:$true] %s605
          %s607 = sshll.u32 %s604, 4
          %611 = dma.vmem_to_hbm [thread:$0]  (%p600), %s606, %s607, %s603, %s584, 256, 256, 16
        $region52: #{tpu_custom_call.1} parent=35 // pred_fallthru
          _
      $region36: #{tpu_custom_call.1} parent=5 // pred_fallthru
        _
      %p612 = scmp.le.s32.totalorder 2, %s18
      // Predicated region
      $region53: #{tpu_custom_call.1} parent=5 // pred_check
        %p613 = pneg %p612
      $region54: #{tpu_custom_call.1} parent=5 // pred_check_branch
        %615 = sbr.rel (%p613) target = $region56
      $region55: #{tpu_custom_call.1} parent=5 // pred_region
        %s616 = ssub.s32 %s18, 2
        // Predicated region
        $region57: #{tpu_custom_call.1} parent=55 // pred_check
          %p617 = pneg %p136
        $region58: #{tpu_custom_call.1} parent=55 // pred_check_branch
          %619 = sbr.rel (%p617) target = $region60
        $region59: #{tpu_custom_call.1} parent=55 // pred_region
          %s620 = sand.u32 %s121, 1
          %s621 = scalar_lea.sflag [#allocation4], %s620
          %s622 = sand.u32 %s121, 1
          %s623 = smul.addr %s622, 128
          %s624 = scalar_lea.vmem [#allocation9], %s623
          %625 = dma.done %s621, 2048
        $region60: #{tpu_custom_call.1} parent=55 // pred_fallthru
          _
      $region56: #{tpu_custom_call.1} parent=5 // pred_fallthru
        _
    $region6: #{tpu_custom_call.1} parent=1 // loop_footer
      %s22 = sadd.s32 1, %s18
    $region7: #{tpu_custom_call.1} parent=1 // loop_footer_branch
      %17 = sbr.rel target = $region3
    $region8: #{tpu_custom_call.1} parent=1 // loop_exit
      _
    %626 = vsyncpa [#allocation3], 1
    %s627 = scalar_lea.sflag [#allocation3], 1
    %628 = vsyncpa %s627, 1
    %629 = vsyncpa [#allocation4], 1
    %s630 = scalar_lea.sflag [#allocation4], 1
    %631 = vsyncpa %s630, 1
    %632 = vsyncpa [#allocation5], 1
    %s633 = scalar_lea.sflag [#allocation5], 1
    %634 = vsyncpa %s633, 1
    %635 = vsyncpa [#allocation6], 1
    %s636 = scalar_lea.sflag [#allocation6], 1
    %637 = vsyncpa %s636, 1

</llo_original>
